<compile_context>
chip_gen: v6e
topology: v6e:2x2x1
jax: 0.10.0
libtpu: 0.0.40
codegen_flags: <defaults>
</compile_context>

<pallas_src>
import functools
import math

import jax
import jax.numpy as jnp
from jax import lax
from jax.experimental import pallas as pl
from jax.experimental.pallas import tpu as pltpu


def _round_up(a, b):
    return ((a + b - 1) // b) * b


def _stats_kernel(w_ref, p_ref, mean_ref, scale_ref, *, m_rows, eps):
    """Pass 1: accumulate per-channel sum / sumsq; finalize to (mean, scale)."""
    i = pl.program_id(0)

    @pl.when(i == 0)
    def _():
        mean_ref[...] = jnp.zeros_like(mean_ref)   # holds running sum
        scale_ref[...] = jnp.zeros_like(scale_ref)  # holds running sum of squares

    # Conv tile as MXU matmul: (OC, K) @ (K, tile_M) -> (OC, tile_M), f32.
    y = jnp.dot(w_ref[...], p_ref[...], preferred_element_type=jnp.float32)

    # Zero-padded M columns give y == 0, neutral for both accumulators.
    mean_ref[...] += jnp.sum(y, axis=1, keepdims=True)
    scale_ref[...] += jnp.sum(y * y, axis=1, keepdims=True)

    @pl.when(i == pl.num_programs(0) - 1)
    def _():
        s = mean_ref[...]
        ss = scale_ref[...]
        mean = s * (1.0 / m_rows)
        # Unbiased variance (torch.std divides by M-1). sum/sumsq accumulation
        # is fine at these scales; for very large M a centered/Welford combine
        # would be numerically safer.
        denom_n = max(m_rows - 1.0, 1.0)
        var = jnp.maximum(ss - m_rows * mean * mean, 0.0) * (1.0 / denom_n)
        std = jnp.sqrt(var)
        d = std + eps
        # EUP approximate reciprocal + one Newton refinement (runs once over
        # OC scalars -> negligible cost, accuracy well inside 1e-4).
        r = pl.reciprocal(d, approx=True)
        r = r * (2.0 - d * r)
        mean_ref[...] = mean     # ActNorm loc = -mean  (applied as y - mean)
        scale_ref[...] = r       # ActNorm scale = 1/(std + eps)


def _normalize_kernel(w_ref, mean_ref, scale_ref, p_ref, out_ref, *, negative_slope):
    """Pass 2: recompute conv tile, apply ActNorm affine + LeakyReLU."""
    y = jnp.dot(w_ref[...], p_ref[...], preferred_element_type=jnp.float32)
    h = (y - mean_ref[...]) * scale_ref[...]
    # LeakyReLU(0.2): single VPU max (valid since 0 < slope < 1).
    out_ref[...] = jnp.maximum(h, negative_slope * h)


def feature_layer_forward(x, weight, *, negative_slope=0.2, eps=1e-6, tile_m=512):
    """x: (N, C, H, W) f32, weight: (OC, C, 4, 4) f32 -> (N, OC, H//2, W//2) f32."""
    N, C, H, W = x.shape
    OC, Cw, KH, KW = weight.shape
    assert Cw == C and KH == 4 and KW == 4
    stride, pad = 2, 1
    OH = (H + 2 * pad - KH) // stride + 1
    OW = (W + 2 * pad - KW) // stride + 1
    M = N * OH * OW
    K = C * KH * KW

    tile_m = min(tile_m, _round_up(M, 128))
    m_pad = _round_up(M, tile_m)
    n_tiles = m_pad // tile_m

    # --- im2col glue (plain JAX), laid out (K, M): K = c*16 + ky*4 + kx,
    #     M = n*OH*OW + oh*OW + ow, so M is the lane axis inside the kernel.
    xp = jnp.pad(x, ((0, 0), (0, 0), (pad, pad), (pad, pad)))
    cols = jnp.stack(
        [xp[:, :, ky:ky + stride * OH:stride, kx:kx + stride * OW:stride]
         for ky in range(KH) for kx in range(KW)],
        axis=2,
    )                                                  # (N, C, 16, OH, OW)
    patches = cols.transpose(1, 2, 0, 3, 4).reshape(K, M).astype(jnp.float32)
    if m_pad != M:
        patches = jnp.pad(patches, ((0, 0), (0, m_pad - M)))
    w2d = weight.reshape(OC, K).astype(jnp.float32)    # (OC, K)

    cparams_stats = pltpu.CompilerParams(
        dimension_semantics=("arbitrary",),
        vmem_limit_bytes=32 * 1024 * 1024,
    )
    cparams_norm = pltpu.CompilerParams(
        dimension_semantics=("parallel",),
        vmem_limit_bytes=32 * 1024 * 1024,
    )

    # ---- pass 1: per-channel statistics over all M positions ----
    stats_kernel = functools.partial(_stats_kernel, m_rows=float(M), eps=eps)
    mean, scale = pl.pallas_call(
        stats_kernel,
        out_shape=(jax.ShapeDtypeStruct((OC, 1), jnp.float32),
                   jax.ShapeDtypeStruct((OC, 1), jnp.float32)),
        grid_spec=pltpu.PrefetchScalarGridSpec(
            num_scalar_prefetch=0,
            grid=(n_tiles,),
            in_specs=[pl.BlockSpec((OC, K), lambda i: (0, 0)),
                      pl.BlockSpec((K, tile_m), lambda i: (0, i))],
            out_specs=(pl.BlockSpec((OC, 1), lambda i: (0, 0)),
                       pl.BlockSpec((OC, 1), lambda i: (0, 0)))),
        compiler_params=cparams_stats,
    )(w2d, patches)

    # ---- pass 2: normalize + LeakyReLU, lane-dense (OC, M) output ----
    norm_kernel = functools.partial(_normalize_kernel, negative_slope=negative_slope)
    out_flat = pl.pallas_call(
        norm_kernel,
        out_shape=jax.ShapeDtypeStruct((OC, m_pad), jnp.float32),
        grid_spec=pltpu.PrefetchScalarGridSpec(
            num_scalar_prefetch=0,
            grid=(n_tiles,),
            in_specs=[pl.BlockSpec((OC, K), lambda i: (0, 0)),
                      pl.BlockSpec((OC, 1), lambda i: (0, 0)),
                      pl.BlockSpec((OC, 1), lambda i: (0, 0)),
                      pl.BlockSpec((K, tile_m), lambda i: (0, i))],
            out_specs=pl.BlockSpec((OC, tile_m), lambda i: (0, i))),
        compiler_params=cparams_norm,
    )(w2d, mean, scale, patches)

    # (OC, M) -> (N, OC, OH, OW)
    return out_flat[:, :M].reshape(OC, N, OH, OW).transpose(1, 0, 2, 3)


def _reference_forward(x, weight, *, negative_slope=0.2, eps=1e-6):
    """Pure-JAX reference of the PyTorch FeatureLayer first forward pass."""
    y = lax.conv_general_dilated(
        x, weight, window_strides=(2, 2), padding=((1, 1), (1, 1)),
        dimension_numbers=("NCHW", "OIHW", "NCHW"))
    flat = y.transpose(1, 0, 2, 3).reshape(y.shape[1], -1)  # (OC, N*OH*OW)
    mean = flat.mean(axis=1)
    std = jnp.sqrt(jnp.sum((flat - mean[:, None]) ** 2, axis=1) / (flat.shape[1] - 1))
    loc = -mean[None, :, None, None]
    scale = 1.0 / (std + eps)[None, :, None, None]
    h = scale * (y + loc)
    return jnp.where(h >= 0.0, h, negative_slope * h)


if __name__ == "__main__":
    # FeatureLayer(scale=1, in_channels=4, norm='AN', width_multiplier=0.25):
    #   in_channels = 4, out_channels = int(0.25 * 64 * min(2**1, 16)) = 32
    scale_lvl = 1
    wm = 0.25
    in_channels = 4
    out_channels = int(wm * 64 * min(2 ** scale_lvl, 16))  # 32

    key = jax.random.PRNGKey(0)
    kx, kw = jax.random.split(key)

    N, H, W = 2, 16, 16
    x = jax.random.normal(kx, (N, in_channels, H, W), dtype=jnp.float32)

    # Deterministic Conv2d weight init (kaiming-uniform-like bound), no bias.
    fan_in = in_channels * 4 * 4
    bound = 1.0 / math.sqrt(fan_in)
    weight = jax.random.uniform(
        kw, (out_channels, in_channels, 4, 4),
        minval=-bound, maxval=bound, dtype=jnp.float32)

    out = feature_layer_forward(x, weight)
    out = jax.block_until_ready(out)

    ref = _reference_forward(x, weight)
    assert out.shape == (N, out_channels, H // 2, W // 2), out.shape
    err = float(jnp.max(jnp.abs(out - ref)))
    assert jnp.allclose(out, ref, atol=1e-4, rtol=1e-4), err

    print("KERNEL_OK")
</pallas_src>

<mosaic_0001>
module attributes {stable_mosaic.version = 11 : i64} {
  func.func @_stats_kernel(%arg0: i32, %arg1: memref<32x64xf32, #tpu.memory_space<vmem>>, %arg2: memref<64x128xf32, #tpu.memory_space<vmem>>, %arg3: memref<32x1xf32, #tpu.memory_space<vmem>>, %arg4: memref<32x1xf32, #tpu.memory_space<vmem>>) attributes {dimension_semantics = [#tpu.dimension_semantics<arbitrary>], iteration_bounds = array<i64: 1>, scalar_prefetch = 0 : i64, scratch_operands = 0 : i64, tpu.core_type = #tpu.core_type<tc>, window_params = [{pipeline_mode = #tpu.pipeline_mode<synchronous>, transform_indices = @transform_0, window_bounds = array<i64: 32, 64>}, {transform_indices = @transform_1, window_bounds = array<i64: 64, 128>}, {pipeline_mode = #tpu.pipeline_mode<synchronous>, transform_indices = @transform_2, window_bounds = array<i64: 32, 1>}, {pipeline_mode = #tpu.pipeline_mode<synchronous>, transform_indices = @transform_3, window_bounds = array<i64: 32, 1>}]} {
    %c0_i32 = arith.constant 0 : i32
    %0 = arith.cmpi eq, %arg0, %c0_i32 : i32
    %1 = arith.extui %0 : i1 to i32
    %c0_i32_0 = arith.constant 0 : i32
    %2 = arith.cmpi ne, %1, %c0_i32_0 : i32
    scf.if %2 {
      %cst_16 = arith.constant 0.000000e+00 : f32
      %20 = vector.broadcast %cst_16 : f32 to vector<32x1xf32>
      %c0_17 = arith.constant 0 : index
      %c0_18 = arith.constant 0 : index
      %21 = vector.load %arg3[%c0_17, %c0_18] : memref<32x1xf32, #tpu.memory_space<vmem>>, vector<32x1xf32>
      tpu.vector_store %arg3[%c0_17, %c0_18], %20 {strides = array<i32>} : memref<32x1xf32, #tpu.memory_space<vmem>>, vector<32x1xf32>,
      %cst_19 = arith.constant 0.000000e+00 : f32
      %22 = vector.broadcast %cst_19 : f32 to vector<32x1xf32>
      %c0_20 = arith.constant 0 : index
      %c0_21 = arith.constant 0 : index
      %23 = vector.load %arg4[%c0_20, %c0_21] : memref<32x1xf32, #tpu.memory_space<vmem>>, vector<32x1xf32>
      tpu.vector_store %arg4[%c0_20, %c0_21], %22 {strides = array<i32>} : memref<32x1xf32, #tpu.memory_space<vmem>>, vector<32x1xf32>,
    } else {
    }
    %c0 = arith.constant 0 : index
    %c0_1 = arith.constant 0 : index
    %3 = vector.load %arg1[%c0, %c0_1] : memref<32x64xf32, #tpu.memory_space<vmem>>, vector<32x64xf32>
    %c0_2 = arith.constant 0 : index
    %c0_3 = arith.constant 0 : index
    %4 = vector.load %arg2[%c0_2, %c0_3] : memref<64x128xf32, #tpu.memory_space<vmem>>, vector<64x128xf32>
    %cst = arith.constant dense<0.000000e+00> : vector<32x128xf32>
    %5 = tpu.matmul %3, %4, %cst {dimension_numbers = #tpu.dot_dimension_numbers<[1], [0], [0], [1], [0, 0, 1, 1], [], []>} : vector<32x64xf32>, vector<64x128xf32>, vector<32x128xf32> -> vector<32x128xf32>
    %c0_4 = arith.constant 0 : index
    %c0_5 = arith.constant 0 : index
    %6 = vector.load %arg3[%c0_4, %c0_5] : memref<32x1xf32, #tpu.memory_space<vmem>>, vector<32x1xf32>
    %cst_6 = arith.constant dense<0.000000e+00> : vector<32xf32>
    %7 = vector.multi_reduction <add>, %5, %cst_6 [1] : vector<32x128xf32> to vector<32xf32>
    %8 = vector.shape_cast %7 : vector<32xf32> to vector<32x1xf32>
    %9 = arith.addf %6, %8 : vector<32x1xf32>
    %c0_7 = arith.constant 0 : index
    %c0_8 = arith.constant 0 : index
    %10 = vector.load %arg3[%c0_7, %c0_8] : memref<32x1xf32, #tpu.memory_space<vmem>>, vector<32x1xf32>
    tpu.vector_store %arg3[%c0_7, %c0_8], %9 {strides = array<i32>} : memref<32x1xf32, #tpu.memory_space<vmem>>, vector<32x1xf32>,
    %c0_9 = arith.constant 0 : index
    %c0_10 = arith.constant 0 : index
    %11 = vector.load %arg4[%c0_9, %c0_10] : memref<32x1xf32, #tpu.memory_space<vmem>>, vector<32x1xf32>
    %12 = arith.mulf %5, %5 : vector<32x128xf32>
    %cst_11 = arith.constant dense<0.000000e+00> : vector<32xf32>
    %13 = vector.multi_reduction <add>, %12, %cst_11 [1] : vector<32x128xf32> to vector<32xf32>
    %14 = vector.shape_cast %13 : vector<32xf32> to vector<32x1xf32>
    %15 = arith.addf %11, %14 : vector<32x1xf32>
    %c0_12 = arith.constant 0 : index
    %c0_13 = arith.constant 0 : index
    %16 = vector.load %arg4[%c0_12, %c0_13] : memref<32x1xf32, #tpu.memory_space<vmem>>, vector<32x1xf32>
    tpu.vector_store %arg4[%c0_12, %c0_13], %15 {strides = array<i32>} : memref<32x1xf32, #tpu.memory_space<vmem>>, vector<32x1xf32>,
    %c0_i32_14 = arith.constant 0 : i32
    %17 = arith.cmpi eq, %arg0, %c0_i32_14 : i32
    %18 = arith.extui %17 : i1 to i32
    %c0_i32_15 = arith.constant 0 : i32
    %19 = arith.cmpi ne, %18, %c0_i32_15 : i32
    scf.if %19 {
      %c0_16 = arith.constant 0 : index
      %c0_17 = arith.constant 0 : index
      %20 = vector.load %arg3[%c0_16, %c0_17] : memref<32x1xf32, #tpu.memory_space<vmem>>, vector<32x1xf32>
      %c0_18 = arith.constant 0 : index
      %c0_19 = arith.constant 0 : index
      %21 = vector.load %arg4[%c0_18, %c0_19] : memref<32x1xf32, #tpu.memory_space<vmem>>, vector<32x1xf32>
      %cst_20 = arith.constant 7.812500e-03 : f32
      %22 = vector.broadcast %cst_20 : f32 to vector<32x1xf32>
      %23 = arith.mulf %20, %22 : vector<32x1xf32>
      %cst_21 = arith.constant 1.280000e+02 : f32
      %24 = vector.broadcast %cst_21 : f32 to vector<32x1xf32>
      %25 = arith.mulf %24, %23 : vector<32x1xf32>
      %26 = arith.mulf %25, %23 : vector<32x1xf32>
      %27 = arith.subf %21, %26 : vector<32x1xf32>
      %cst_22 = arith.constant 0.000000e+00 : f32
      %28 = vector.broadcast %cst_22 : f32 to vector<32x1xf32>
      %29 = arith.maximumf %27, %28 : vector<32x1xf32>
      %cst_23 = arith.constant 0.00787401571 : f32
      %30 = vector.broadcast %cst_23 : f32 to vector<32x1xf32>
      %31 = arith.mulf %29, %30 : vector<32x1xf32>
      %32 = math.sqrt %31 : vector<32x1xf32>
      %cst_24 = arith.constant 9.99999997E-7 : f32
      %33 = vector.broadcast %cst_24 : f32 to vector<32x1xf32>
      %34 = arith.addf %32, %33 : vector<32x1xf32>
      %35 = tpu.reciprocal %34 {approx = true} : vector<32x1xf32> -> vector<32x1xf32>
      %36 = arith.mulf %34, %35 : vector<32x1xf32>
      %cst_25 = arith.constant 2.000000e+00 : f32
      %37 = vector.broadcast %cst_25 : f32 to vector<32x1xf32>
      %38 = arith.subf %37, %36 : vector<32x1xf32>
      %39 = arith.mulf %35, %38 : vector<32x1xf32>
      %c0_26 = arith.constant 0 : index
      %c0_27 = arith.constant 0 : index
      %40 = vector.load %arg3[%c0_26, %c0_27] : memref<32x1xf32, #tpu.memory_space<vmem>>, vector<32x1xf32>
      tpu.vector_store %arg3[%c0_26, %c0_27], %23 {strides = array<i32>} : memref<32x1xf32, #tpu.memory_space<vmem>>, vector<32x1xf32>,
      %c0_28 = arith.constant 0 : index
      %c0_29 = arith.constant 0 : index
      %41 = vector.load %arg4[%c0_28, %c0_29] : memref<32x1xf32, #tpu.memory_space<vmem>>, vector<32x1xf32>
      tpu.vector_store %arg4[%c0_28, %c0_29], %39 {strides = array<i32>} : memref<32x1xf32, #tpu.memory_space<vmem>>, vector<32x1xf32>,
    } else {
    }
    return
  }
  func.func @transform_0(%arg0: i32) -> (i32, i32) {
    %c0_i32 = arith.constant 0 : i32
    %c0_i32_0 = arith.constant 0 : i32
    %c0_i32_1 = arith.constant 0 : i32
    return %c0_i32, %c0_i32_0 : i32, i32
  }
  func.func @transform_1(%arg0: i32) -> (i32, i32) {
    %c0_i32 = arith.constant 0 : i32
    %c0_i32_0 = arith.constant 0 : i32
    return %c0_i32, %arg0 : i32, i32
  }
  func.func @transform_2(%arg0: i32) -> (i32, i32) {
    %c0_i32 = arith.constant 0 : i32
    %c0_i32_0 = arith.constant 0 : i32
    %c0_i32_1 = arith.constant 0 : i32
    return %c0_i32, %c0_i32_0 : i32, i32
  }
  func.func @transform_3(%arg0: i32) -> (i32, i32) {
    %c0_i32 = arith.constant 0 : i32
    %c0_i32_0 = arith.constant 0 : i32
    %c0_i32_1 = arith.constant 0 : i32
    return %c0_i32, %c0_i32_0 : i32, i32
  }
}

</mosaic_0001>

<llo_original>
// kernel: tpu_custom_call.1
$region0: #{tpu_custom_call.1}
  #allocation0 [shape = 'u32[]', space=smem, size = 0x4, offset = 0x4, fixed_abs, tag = 'smem constant byte address 0x4 - core index']
  #allocation1 [shape = 'u32[144,128]{1,0:T(1,128)}', space=vmem, size = 0x12000, scoped, tag = 'internal scratch']
  %s0 = inlined_call_operand.hbm [shape: f32[32,64], index: 0, kind: input, shape index: {}]
  %s1 = inlined_call_operand.hbm [shape: f32[64,128], index: 1, kind: input, shape index: {}]
  %s2 = inlined_call_operand.vmem [shape: f32[32,1], index: 2, kind: output, shape index: {0}]
  %s3 = inlined_call_operand.vmem [shape: f32[32,1], index: 3, kind: output, shape index: {1}]
  %4 = xla_tuple %s2, %s3
  %s5 = sld [smem:[#allocation0]]
  $region42: #{tpu_custom_call.1} parent=0
    _
  %s7 = ssub.s32 1, %s5
  %s8 = scalar_select 0, %s7, %s5
  $region1: #{tpu_custom_call.1} parent=0
    #allocation2 [shape = 'u8[16384]{0}', space=vmem, size = 0x4000, scoped, tag = 'input window, operand 0, single buffered']
    #allocation3 [shape = 's32[1]{0}', space=sflag, size = 0x4, scoped, tag = 'scoped memory for tpu_custom_call.1']
    #allocation4 [shape = 'u8[32768]{0}', space=vmem, size = 0x8000, scoped, tag = 'input window, operand 1, single buffered']
    #allocation5 [shape = 's32[1]{0}', space=sflag, size = 0x4, scoped, tag = 'scoped memory for tpu_custom_call.1']
    %9 = vsyncpa [#allocation3], 0
    %10 = vsyncpa [#allocation5], 0
    // Predicated region
    $region2: #{tpu_custom_call.1} parent=1 // pred_check
      _
    $region3: #{tpu_custom_call.1} parent=1 // pred_check_branch
      %12 = sbr.rel (0) target = $region5
    $region4: #{tpu_custom_call.1} parent=1 // pred_region
      %s14 = ssub.s32 512, 512
      %15 = vsyncadd [#allocation3], %s14
      %s16 = sshll.u32 [#allocation2], 4
      %s17 = int_to_ptr.vmem [resolvable:$true] %s16
      %22 = dma.hbm_to_vmem [thread:$0]  %s0, 512, %s17, [#allocation3], 128, 128, 8
    $region5: #{tpu_custom_call.1} parent=1 // pred_fallthru
      _
    // Predicated region
    $region6: #{tpu_custom_call.1} parent=1 // pred_check
      _
    $region7: #{tpu_custom_call.1} parent=1 // pred_check_branch
      %24 = sbr.rel (0) target = $region9
    $region8: #{tpu_custom_call.1} parent=1 // pred_region
      %s26 = ssub.s32 1024, 1024
      %27 = vsyncadd [#allocation5], %s26
      %s28 = sshll.u32 [#allocation4], 4
      %s29 = int_to_ptr.vmem [resolvable:$true] %s28
      %34 = dma.hbm_to_vmem [thread:$0]  %s1, 1024, %s29, [#allocation5], 128, 128, 8
    $region9: #{tpu_custom_call.1} parent=1 // pred_fallthru
      _
    // Predicated region
    $region10: #{tpu_custom_call.1} parent=1 // pred_check
      _
    $region11: #{tpu_custom_call.1} parent=1 // pred_check_branch
      %36 = sbr.rel (0) target = $region13
    $region12: #{tpu_custom_call.1} parent=1 // pred_region
      %37 = dma.done [#allocation3], 512
    $region13: #{tpu_custom_call.1} parent=1 // pred_fallthru
      _
    // Predicated region
    $region14: #{tpu_custom_call.1} parent=1 // pred_check
      _
    $region15: #{tpu_custom_call.1} parent=1 // pred_check_branch
      %39 = sbr.rel (0) target = $region17
    $region16: #{tpu_custom_call.1} parent=1 // pred_region
      %40 = dma.done [#allocation5], 1024
    $region17: #{tpu_custom_call.1} parent=1 // pred_fallthru
      _
    %p41 = scmp.eq.s32.totalorder 0, 0
    // Predicated region
    $region18: #{tpu_custom_call.1} parent=1 // pred_check
      %p42 = pneg %p41
    $region19: #{tpu_custom_call.1} parent=1 // pred_check_branch
      %44 = sbr.rel (%p42) target = $region21
    $region20: #{tpu_custom_call.1} parent=1 // pred_region
      %vm45 = vcmask 7168
      %46 = vst.msk [vmem:[%s2] sm:$0xff] %vm45, 0.0
      %47 = vst.msk [vmem:[%s2 + $0x8] sm:$0xff] %vm45, 0.0
      %48 = vst.msk [vmem:[%s2 + $0x10] sm:$0xff] %vm45, 0.0
      %49 = vst.msk [vmem:[%s2 + $0x18] sm:$0xff] %vm45, 0.0
      %50 = vst.msk [vmem:[%s3] sm:$0xff] %vm45, 0.0
      %51 = vst.msk [vmem:[%s3 + $0x8] sm:$0xff] %vm45, 0.0
      %52 = vst.msk [vmem:[%s3 + $0x10] sm:$0xff] %vm45, 0.0
      %53 = vst.msk [vmem:[%s3 + $0x18] sm:$0xff] %vm45, 0.0
    $region21: #{tpu_custom_call.1} parent=1 // pred_fallthru
      _
    %v54 = vld [vmem:[#allocation2] sm:$0xff]
    %v55 = vld [vmem:[#allocation2 + $0x8] sm:$0xff]
    %v56 = vld [vmem:[#allocation2 + $0x10] sm:$0xff]
    %v57 = vld [vmem:[#allocation2 + $0x18] sm:$0xff]
    %v58 = vld [vmem:[#allocation4] sm:$0xff]
    %v59 = vld [vmem:[#allocation4 + $0x8] sm:$0xff]
    %v60 = vld [vmem:[#allocation4 + $0x10] sm:$0xff]
    %v61 = vld [vmem:[#allocation4 + $0x18] sm:$0xff]
    %v62 = vld [vmem:[#allocation4 + $0x20] sm:$0xff]
    %v63 = vld [vmem:[#allocation4 + $0x28] sm:$0xff]
    %v64 = vld [vmem:[#allocation4 + $0x30] sm:$0xff]
    %v65 = vld [vmem:[#allocation4 + $0x38] sm:$0xff]
    %vm66 = vcmask 523264
    %v68 = vsel %vm66, %v54, 0
    %v71 = vsel %vm66, %v55, 0
    %v74 = vsel %vm66, %v56, 0
    %v77 = vsel %vm66, %v57, 0
    %79 = vmatprep.subr.mxu0 0.0
    %80 = vmatpush1.msra.mxu0 0.0
    %81 = vmatprep.subr.mxu0 0.0
    %82 = vmatpush1.msra.mxu0 0.0
    %83 = vmatprep.subr.mxu0 0.0
    %84 = vmatpush1.msra.mxu0 0.0
    %85 = vmatprep.subr.mxu0 0.0
    %86 = vmatpush1.msra.mxu0 0.0
    %87 = vmatprep.subr.mxu0 0.0
    %88 = vmatpush1.msra.mxu0 0.0
    %89 = vmatprep.subr.mxu0 0.0
    %90 = vmatpush1.msra.mxu0 0.0
    %91 = vmatprep.subr.mxu0 0.0
    %92 = vmatpush1.msra.mxu0 0.0
    %93 = vmatprep.subr.mxu0 0.0
    %94 = vmatpush1.msra.mxu0 0.0
    %95 = vmatprep.subr.mxu0 0.0
    %96 = vmatpush1.msra.mxu0 %v65
    %97 = vmatprep.subr.mxu0 0.0
    %98 = vmatpush1.msra.mxu0 %v64
    %99 = vmatprep.subr.mxu0 0.0
    %100 = vmatpush1.msra.mxu0 %v63
    %101 = vmatprep.subr.mxu0 0.0
    %102 = vmatpush1.msra.mxu0 %v62
    %103 = vmatprep.subr.mxu0 0.0
    %104 = vmatpush1.msra.mxu0 %v61
    %105 = vmatprep.subr.mxu0 0.0
    %106 = vmatpush1.msra.mxu0 %v60
    %107 = vmatprep.subr.mxu0 0.0
    %108 = vmatpush1.msra.mxu0 %v59
    %109 = vmatprep.subr.mxu0 0.0
    %110 = vmatpush1.msra.mxu0 %v58
    %111 = vmatprep.subr.mxu0 0.0
    %112 = vmatpush2.msra.mxu0 0.0
    %113 = vmatprep.subr.mxu0 0.0
    %114 = vmatpush2.msra.mxu0 0.0
    %115 = vmatprep.subr.mxu0 0.0
    %116 = vmatpush2.msra.mxu0 0.0
    %117 = vmatprep.subr.mxu0 0.0
    %118 = vmatpush2.msra.mxu0 0.0
    %119 = vmatprep.subr.mxu0 0.0
    %120 = vmatpush2.msra.mxu0 0.0
    %121 = vmatprep.subr.mxu0 0.0
    %122 = vmatpush2.msra.mxu0 0.0
    %123 = vmatprep.subr.mxu0 0.0
    %124 = vmatpush2.msra.mxu0 0.0
    %125 = vmatprep.subr.mxu0 0.0
    %126 = vmatpush2.msra.mxu0 0.0
    %127 = vmatprep.subr.mxu0 0.0
    %128 = vmatpush2.msra.mxu0 0.0
    %129 = vmatprep.subr.mxu0 0.0
    %130 = vmatpush2.msra.mxu0 0.0
    %131 = vmatprep.subr.mxu0 0.0
    %132 = vmatpush2.msra.mxu0 0.0
    %133 = vmatprep.subr.mxu0 0.0
    %134 = vmatpush2.msra.mxu0 0.0
    %135 = vmatprep.subr.mxu0 0.0
    %136 = vmatpush2.msra.mxu0 0.0
    %137 = vmatprep.subr.mxu0 0.0
    %138 = vmatpush2.msra.mxu0 0.0
    %139 = vmatprep.subr.mxu0 0.0
    %140 = vmatpush2.msra.mxu0 0.0
    %141 = vmatprep.subr.mxu0 0.0
    %142 = vmatpush2.msra.mxu0 0.0
    %143 = vmatprep.mubr.f32.mxu0 0.0
    %144 = vmatmul.mubr.f32.gmra.mxu0 %v68
    %v145 = vpop.f32.mrf.mxu0
    %v146 = vadd.f32 0.0, %v145
    %v147 = vpop.f32.mrf.mxu0
    %148 = vmatprep.mubr.f32.mxu0 0.0
    %149 = vmatmul.mubr.f32.gmra.mxu0 %v71
    %v150 = vpop.f32.mrf.mxu0
    %v151 = vadd.f32 0.0, %v150
    %v152 = vpop.f32.mrf.mxu0
    %153 = vmatprep.mubr.f32.mxu0 0.0
    %154 = vmatmul.mubr.f32.gmra.mxu0 %v74
    %v155 = vpop.f32.mrf.mxu0
    %v156 = vadd.f32 0.0, %v155
    %v157 = vpop.f32.mrf.mxu0
    %158 = vmatprep.mubr.f32.mxu0 0.0
    %159 = vmatmul.mubr.f32.gmra.mxu0 %v77
    %v160 = vpop.f32.mrf.mxu0
    %v161 = vadd.f32 0.0, %v160
    %v162 = vpop.f32.mrf.mxu0
    %163 = vdwg.mxu0
    %v164 = vld [vmem:[%s2] sm:$0xff]
    %v165 = vld [vmem:[%s2 + $0x8] sm:$0xff]
    %v166 = vld [vmem:[%s2 + $0x10] sm:$0xff]
    %v167 = vld [vmem:[%s2 + $0x18] sm:$0xff]
    %168 = vadd.xlane.f32.xlu0 %v146
    %v169 = vpop.xlane.xlu0 %168
    %170 = vadd.xlane.f32.xlu0 %v151
    %v171 = vpop.xlane.xlu0 %170
    %172 = vadd.xlane.f32.xlu0 %v156
    %v173 = vpop.xlane.xlu0 %172
    %174 = vadd.xlane.f32.xlu0 %v161
    %v175 = vpop.xlane.xlu0 %174
    %v176 = vadd.f32 %v164, %v169
    %v177 = vadd.f32 %v165, %v171
    %v178 = vadd.f32 %v166, %v173
    %v179 = vadd.f32 %v167, %v175
    %vm180 = vcmask 7168
    %181 = vst.msk [vmem:[%s2] sm:$0xff] %vm180, %v176
    %182 = vst.msk [vmem:[%s2 + $0x8] sm:$0xff] %vm180, %v177
    %183 = vst.msk [vmem:[%s2 + $0x10] sm:$0xff] %vm180, %v178
    %184 = vst.msk [vmem:[%s2 + $0x18] sm:$0xff] %vm180, %v179
    %v185 = vld [vmem:[%s3] sm:$0xff]
    %v186 = vld [vmem:[%s3 + $0x8] sm:$0xff]
    %v187 = vld [vmem:[%s3 + $0x10] sm:$0xff]
    %v188 = vld [vmem:[%s3 + $0x18] sm:$0xff]
    %v189 = vmul.f32 %v146, %v146
    %v190 = vmul.f32 %v151, %v151
    %v191 = vmul.f32 %v156, %v156
    %v192 = vmul.f32 %v161, %v161
    %193 = vadd.xlane.f32.xlu0 %v189
    %v194 = vpop.xlane.xlu0 %193
    %195 = vadd.xlane.f32.xlu0 %v190
    %v196 = vpop.xlane.xlu0 %195
    %197 = vadd.xlane.f32.xlu0 %v191
    %v198 = vpop.xlane.xlu0 %197
    %199 = vadd.xlane.f32.xlu0 %v192
    %v200 = vpop.xlane.xlu0 %199
    %v201 = vadd.f32 %v185, %v194
    %v202 = vadd.f32 %v186, %v196
    %v203 = vadd.f32 %v187, %v198
    %v204 = vadd.f32 %v188, %v200
    %205 = vst.msk [vmem:[%s3] sm:$0xff] %vm180, %v201
    %206 = vst.msk [vmem:[%s3 + $0x8] sm:$0xff] %vm180, %v202
    %207 = vst.msk [vmem:[%s3 + $0x10] sm:$0xff] %vm180, %v203
    %208 = vst.msk [vmem:[%s3 + $0x18] sm:$0xff] %vm180, %v204
    // Predicated region
    $region22: #{tpu_custom_call.1} parent=1 // pred_check
      %p209 = pneg %p41
    $region23: #{tpu_custom_call.1} parent=1 // pred_check_branch
      %211 = sbr.rel (%p209) target = $region25
    $region24: #{tpu_custom_call.1} parent=1 // pred_region
      %v212 = vld [vmem:[%s2] sm:$0xff]
      %v213 = vld [vmem:[%s2 + $0x8] sm:$0xff]
      %v214 = vld [vmem:[%s2 + $0x10] sm:$0xff]
      %v215 = vld [vmem:[%s2 + $0x18] sm:$0xff]
      %v216 = vld [vmem:[%s3] sm:$0xff]
      %v217 = vld [vmem:[%s3 + $0x8] sm:$0xff]
      %v218 = vld [vmem:[%s3 + $0x10] sm:$0xff]
      %v219 = vld [vmem:[%s3 + $0x18] sm:$0xff]
      %v220 = vmul.f32 %v212, 0.0078125
      %v221 = vmul.f32 %v213, 0.0078125
      %v222 = vmul.f32 %v214, 0.0078125
      %v223 = vmul.f32 %v215, 0.0078125
      %v224 = vmul.f32 %v220, 128.0
      %v225 = vmul.f32 %v221, 128.0
      %v226 = vmul.f32 %v222, 128.0
      %v227 = vmul.f32 %v223, 128.0
      %v228 = vmul.f32 %v224, %v220
      %v229 = vmul.f32 %v225, %v221
      %v230 = vmul.f32 %v226, %v222
      %v231 = vmul.f32 %v227, %v223
      %v232 = vsub.f32 %v216, %v228
      %v233 = vsub.f32 %v217, %v229
      %v234 = vsub.f32 %v218, %v230
      %v235 = vsub.f32 %v219, %v231
      %v236 = vmax.f32 %v232, 0.0
      %v237 = vmax.f32 %v233, 0.0
      %v238 = vmax.f32 %v234, 0.0
      %v239 = vmax.f32 %v235, 0.0
      %v240 = vmul.f32 %v236, 0.007874016
      %v241 = vmul.f32 %v237, 0.007874016
      %v242 = vmul.f32 %v238, 0.007874016
      %v243 = vmul.f32 %v239, 0.007874016
      %v244 = vrsqrt.pop %v240
      %v245 = vmul.f32 %v240, %v244
      %vm246 = vcmp.eq.f32.partialorder %v240, inf
      %v247 = vsel %vm246, %v240, %v245
      %vm248 = vcmp.eq.f32.partialorder %v240, 0.0
      %v249 = vand.u32 %v240, 2147483648
      %v250 = vsel %vm248, %v249, %v247
      %v251 = vrsqrt.pop %v241
      %v252 = vmul.f32 %v241, %v251
      %vm253 = vcmp.eq.f32.partialorder %v241, inf
      %v254 = vsel %vm253, %v241, %v252
      %vm255 = vcmp.eq.f32.partialorder %v241, 0.0
      %v256 = vand.u32 %v241, 2147483648
      %v257 = vsel %vm255, %v256, %v254
      %v258 = vrsqrt.pop %v242
      %v259 = vmul.f32 %v242, %v258
      %vm260 = vcmp.eq.f32.partialorder %v242, inf
      %v261 = vsel %vm260, %v242, %v259
      %vm262 = vcmp.eq.f32.partialorder %v242, 0.0
      %v263 = vand.u32 %v242, 2147483648
      %v264 = vsel %vm262, %v263, %v261
      %v265 = vrsqrt.pop %v243
      %v266 = vmul.f32 %v243, %v265
      %vm267 = vcmp.eq.f32.partialorder %v243, inf
      %v268 = vsel %vm267, %v243, %v266
      %vm269 = vcmp.eq.f32.partialorder %v243, 0.0
      %v270 = vand.u32 %v243, 2147483648
      %v271 = vsel %vm269, %v270, %v268
      %v272 = vadd.f32 %v250, 1e-06
      %v273 = vadd.f32 %v257, 1e-06
      %v274 = vadd.f32 %v264, 1e-06
      %v275 = vadd.f32 %v271, 1e-06
      %v276 = vrcp.pop %v272
      %v277 = vrcp.pop %v273
      %v278 = vrcp.pop %v274
      %v279 = vrcp.pop %v275
      %v280 = vmul.f32 %v272, %v276
      %v281 = vmul.f32 %v273, %v277
      %v282 = vmul.f32 %v274, %v278
      %v283 = vmul.f32 %v275, %v279
      %v284 = vsub.f32 2.0, %v280
      %v285 = vsub.f32 2.0, %v281
      %v286 = vsub.f32 2.0, %v282
      %v287 = vsub.f32 2.0, %v283
      %v288 = vmul.f32 %v276, %v284
      %v289 = vmul.f32 %v277, %v285
      %v290 = vmul.f32 %v278, %v286
      %v291 = vmul.f32 %v279, %v287
      %292 = vst.msk [vmem:[%s2] sm:$0xff] %vm180, %v220
      %293 = vst.msk [vmem:[%s2 + $0x8] sm:$0xff] %vm180, %v221
      %294 = vst.msk [vmem:[%s2 + $0x10] sm:$0xff] %vm180, %v222
      %295 = vst.msk [vmem:[%s2 + $0x18] sm:$0xff] %vm180, %v223
      %296 = vst.msk [vmem:[%s3] sm:$0xff] %vm180, %v288
      %297 = vst.msk [vmem:[%s3 + $0x8] sm:$0xff] %vm180, %v289
      %298 = vst.msk [vmem:[%s3 + $0x10] sm:$0xff] %vm180, %v290
      %299 = vst.msk [vmem:[%s3 + $0x18] sm:$0xff] %vm180, %v291
    $region25: #{tpu_custom_call.1} parent=1 // pred_fallthru
      _
    // Predicated region
    $region26: #{tpu_custom_call.1} parent=1 // pred_check
      _
    $region27: #{tpu_custom_call.1} parent=1 // pred_check_branch
      %301 = sbr.rel (0) target = $region29
    $region28: #{tpu_custom_call.1} parent=1 // pred_region
      _
    $region29: #{tpu_custom_call.1} parent=1 // pred_fallthru
      _
    // Predicated region
    $region30: #{tpu_custom_call.1} parent=1 // pred_check
      _
    $region31: #{tpu_custom_call.1} parent=1 // pred_check_branch
      %303 = sbr.rel (0) target = $region33
    $region32: #{tpu_custom_call.1} parent=1 // pred_region
      _
    $region33: #{tpu_custom_call.1} parent=1 // pred_fallthru
      _
    // Predicated region
    $region34: #{tpu_custom_call.1} parent=1 // pred_check
      _
    $region35: #{tpu_custom_call.1} parent=1 // pred_check_branch
      %305 = sbr.rel (0) target = $region37
    $region36: #{tpu_custom_call.1} parent=1 // pred_region
      _
    $region37: #{tpu_custom_call.1} parent=1 // pred_fallthru
      _
    // Predicated region
    $region38: #{tpu_custom_call.1} parent=1 // pred_check
      _
    $region39: #{tpu_custom_call.1} parent=1 // pred_check_branch
      %307 = sbr.rel (0) target = $region41
    $region40: #{tpu_custom_call.1} parent=1 // pred_region
      _
    $region41: #{tpu_custom_call.1} parent=1 // pred_fallthru
      _
    %308 = vsyncpa [#allocation3], 1
    %309 = vsyncpa [#allocation5], 1

</llo_original>
